<compile_context>
chip_gen: v6e
topology: v6e:2x2x1
jax: 0.10.0
libtpu: 0.0.40
codegen_flags: <defaults>
</compile_context>

<pallas_src>
import functools

import jax
import jax.numpy as jnp
from jax import lax
from jax.experimental import pallas as pl
from jax.experimental.pallas import tpu as pltpu


_VMEM_LIMIT_BYTES = 32 * 1024 * 1024     # conservative: fits v5e/v6e/v7x
_FUSED_VMEM_BUDGET = 20 * 1024 * 1024    # fused-path working set (incl. 2x buffering)


def _cparams(dims):
    return pltpu.CompilerParams(
        dimension_semantics=dims, vmem_limit_bytes=_VMEM_LIMIT_BYTES)


def _pick_tile(dim, preferred, align):
    """Largest tile <= preferred that divides `dim` and is `align`-aligned.

    Falls back to the full dimension (full-extent blocks are exempt from the
    (8, 128) alignment rule)."""
    if dim <= preferred:
        return dim
    t = (preferred // align) * align
    while t >= align:
        if dim % t == 0:
            return t
        t -= align
    # TODO(synk): pad-and-mask the tail instead of a full-extent fallback.
    return dim


def _largest_divisor_leq(n, cap):
    best = 1
    for c in range(1, n + 1):
        if c > cap:
            break
        if n % c == 0:
            best = c
    return best


def _mask_dtype(tq, Lq, mLq):
    """int8 mask (4x less traffic) unless its sublane tile would be illegal."""
    if mLq == 1 or tq == Lq or tq % 32 == 0:
        return jnp.int8
    return jnp.int32


def _mask_block_spec(mshape, b_blk, q_blk, k_blk, n_grid_axes):
    """BlockSpec for a mask kept in its original broadcastable shape."""
    mB, mLq, mLk = mshape
    bb = b_blk if mB != 1 else 1
    qb = q_blk if mLq != 1 else 1
    kb = k_blk if mLk != 1 else 1
    if n_grid_axes == 2:
        def imap(b, qi):
            return (b if mB != 1 else 0, qi if mLq != 1 else 0, 0)
    else:
        def imap(b, qi, ki):
            return (b if mB != 1 else 0,
                    qi if mLq != 1 else 0,
                    ki if mLk != 1 else 0)
    return pl.BlockSpec((bb, qb, kb), imap)


# ---------------------------------------------------------------------------
# Kernels
# ---------------------------------------------------------------------------

def _fused_kernel(inv_scale, has_mask, has_attn, *refs):
    """Single-pass softmax: whole Lk resident, optionally several batches
    folded into one step.  Grid: (B//bb, Lq//tq)."""
    it = iter(refs)
    q_ref, k_ref, v_ref = next(it), next(it), next(it)
    mask_ref = next(it) if has_mask else None
    o_ref = next(it)
    attn_ref = next(it) if has_attn else None

    q = q_ref[...] * inv_scale                          # (bb, tq, Dk)
    s = jnp.einsum("bqd,bkd->bqk", q, k_ref[...],
                   preferred_element_type=jnp.float32)  # (bb, tq, Lk) f32
    if has_mask:
        s = jnp.where(mask_ref[...] != 0, jnp.float32(-1e9), s)

    m = jnp.max(s, axis=-1, keepdims=True)
    p = jnp.exp(s - m)
    l = jnp.sum(p, axis=-1, keepdims=True)
    r = pl.reciprocal(l, approx=True)                   # EUP slot (free-ish)
    r = r * (2.0 - l * r)                               # Newton step -> ~f32
    attn = p * r

    if has_attn:
        attn_ref[...] = attn.astype(attn_ref.dtype)
    o_ref[...] = jnp.einsum(
        "bqk,bkd->bqd", attn.astype(v_ref.dtype), v_ref[...],
        preferred_element_type=jnp.float32).astype(o_ref.dtype)


def _flash_fwd_kernel(inv_scale, has_mask, *refs):
    """Online-softmax (flash) forward.

    Grid: (B, Lq//tq, Lk//tk), Lk innermost/"arbitrary".  Outputs the
    attention output and the per-row log-sum-exp."""
    it = iter(refs)
    q_ref, k_ref, v_ref = next(it), next(it), next(it)
    mask_ref = next(it) if has_mask else None
    o_ref, lse_ref = next(it), next(it)
    q_sc, m_sc, l_sc, acc_sc = next(it), next(it), next(it), next(it)

    ki = pl.program_id(2)

    @pl.when(ki == 0)
    def _init():
        q_sc[...] = q_ref[0] * inv_scale      # scale q once per q tile
        m_sc[...] = jnp.full_like(m_sc, -jnp.inf)
        l_sc[...] = jnp.zeros_like(l_sc)
        acc_sc[...] = jnp.zeros_like(acc_sc)

    s = lax.dot_general(q_sc[...], k_ref[0], (((1,), (1,)), ((), ())),
                        preferred_element_type=jnp.float32)      # (tq, tk)
    if has_mask:
        s = jnp.where(mask_ref[0] != 0, jnp.float32(-1e9), s)

    m_prev = m_sc[...]                                           # (tq, 1)
    m_new = jnp.maximum(m_prev, jnp.max(s, axis=-1, keepdims=True))
    alpha = jnp.exp(m_prev - m_new)
    p = jnp.exp(s - m_new)                                       # (tq, tk)
    l_sc[...] = alpha * l_sc[...] + jnp.sum(p, axis=-1, keepdims=True)
    acc_sc[...] = alpha * acc_sc[...] + jnp.dot(
        p.astype(v_ref.dtype), v_ref[0], preferred_element_type=jnp.float32)
    m_sc[...] = m_new

    @pl.when(ki == pl.num_programs(2) - 1)
    def _finalize():
        l = l_sc[...]
        r = pl.reciprocal(l, approx=True)
        r = r * (2.0 - l * r)                # Newton step -> ~f32 exact
        o_ref[0] = (acc_sc[...] * r).astype(o_ref.dtype)
        lse_ref[0] = m_sc[...] + jnp.log(l)


def _attn_weights_kernel(inv_scale, has_mask, *refs):
    """Exact attention weights from the flash log-sum-exp (recompute QK^T).

    Grid: (B, Lq//tq, Lk//tk), all axes parallel; attn tile is lane-dense."""
    it = iter(refs)
    q_ref, k_ref = next(it), next(it)
    mask_ref = next(it) if has_mask else None
    lse_ref, attn_ref = next(it), next(it)

    q = q_ref[0] * inv_scale
    s = lax.dot_general(q, k_ref[0], (((1,), (1,)), ((), ())),
                        preferred_element_type=jnp.float32)      # (tq, tk)
    if has_mask:
        s = jnp.where(mask_ref[0] != 0, jnp.float32(-1e9), s)
    attn_ref[0] = jnp.exp(s - lse_ref[0]).astype(attn_ref.dtype)


# ---------------------------------------------------------------------------
# Wrapper
# ---------------------------------------------------------------------------

def self_attention(q, k, v, scale, mask=None, *, return_attn=True,
                   q_tile=512, k_tile=2048):
    """Pallas implementation of selfAttention.forward(q, k, v, mask)."""
    B, Lq, Dk = q.shape
    Bk, Lk, Dk2 = k.shape
    Bv, Lkv, Dv = v.shape
    assert (Bk, Dk2) == (B, Dk) and (Bv, Lkv) == (B, Lk)

    itemsize = jnp.dtype(q.dtype).itemsize
    sub_align = {4: 8, 2: 16, 1: 32}.get(itemsize, 8)
    tq = _pick_tile(Lq, q_tile, sub_align)   # sublane-aligned (or full Lq)
    tk = _pick_tile(Lk, k_tile, 128)         # lane-aligned (or full Lk)
    nq, nk = Lq // tq, Lk // tk
    inv_scale = 1.0 / float(scale)

    has_mask = mask is not None
    if has_mask:
        m = jnp.asarray(mask)
        assert m.ndim <= 3, "mask rank must be <= 3"
        m = m.reshape((1,) * (3 - m.ndim) + m.shape)
        mB, mLq, mLk = m.shape
        assert mB in (1, B) and mLq in (1, Lq) and mLk in (1, Lk), \
            "mask must be broadcastable to (B, Lq, Lk)"
        mask_arr = m.astype(_mask_dtype(tq, Lq, mLq))   # no broadcast_to!
        mshape = (mB, mLq, mLk)
    else:
        mask_arr, mshape = None, None

    def fused_bytes(bb):
        per = tq * Dk + Lk * Dk + Lk * Dv + tq * Dv
        if return_attn:
            per += tq * Lk
        total = bb * per * itemsize
        if has_mask:
            total += bb * tq * Lk * mask_arr.dtype.itemsize
        return 2 * total    # double-buffered

    use_fused = (nk == 1) and fused_bytes(1) <= _FUSED_VMEM_BUDGET

    # ---- Fused single-pass path: whole Lk resident in one k tile. ---------
    if use_fused:
        bb = 1
        if nq == 1 and B > 1:   # fold batches for tiny per-step work
            cap = max(1, _FUSED_VMEM_BUDGET // fused_bytes(1))
            bb = _largest_divisor_leq(B, min(cap, B))

        in_specs = [
            pl.BlockSpec((bb, tq, Dk), lambda b, qi: (b, qi, 0)),
            pl.BlockSpec((bb, Lk, Dk), lambda b, qi: (b, 0, 0)),
            pl.BlockSpec((bb, Lk, Dv), lambda b, qi: (b, 0, 0)),
        ]
        args = [q, k, v]
        if has_mask:
            in_specs.append(_mask_block_spec(mshape, bb, tq, Lk, 2))
            args.append(mask_arr)

        o_spec = pl.BlockSpec((bb, tq, Dv), lambda b, qi: (b, qi, 0))
        if return_attn:
            out_shape = (jax.ShapeDtypeStruct((B, Lq, Dv), q.dtype),
                         jax.ShapeDtypeStruct((B, Lq, Lk), q.dtype))
            out_specs = [o_spec,
                         pl.BlockSpec((bb, tq, Lk), lambda b, qi: (b, qi, 0))]
        else:
            out_shape = jax.ShapeDtypeStruct((B, Lq, Dv), q.dtype)
            out_specs = o_spec

        res = pl.pallas_call(
            functools.partial(_fused_kernel, inv_scale, has_mask, return_attn),
            out_shape=out_shape,
            grid_spec=pltpu.PrefetchScalarGridSpec(
                num_scalar_prefetch=0,
                grid=(B // bb, nq),
                in_specs=in_specs,
                out_specs=out_specs),
            compiler_params=_cparams(("parallel", "parallel")),
        )(*args)
        if return_attn:
            out, attn = res
            return out, attn
        return res, None

    # ---- Flash forward: output + log-sum-exp, Lk tiled ("arbitrary"). -----
    in_specs = [
        pl.BlockSpec((1, tq, Dk), lambda b, qi, ki: (b, qi, 0)),
        pl.BlockSpec((1, tk, Dk), lambda b, qi, ki: (b, ki, 0)),  # ki -> Lk axis
        pl.BlockSpec((1, tk, Dv), lambda b, qi, ki: (b, ki, 0)),  # ki -> Lk axis
    ]
    args = [q, k, v]
    if has_mask:
        in_specs.append(_mask_block_spec(mshape, 1, tq, tk, 3))
        args.append(mask_arr)

    out, lse = pl.pallas_call(
        functools.partial(_flash_fwd_kernel, inv_scale, has_mask),
        out_shape=(jax.ShapeDtypeStruct((B, Lq, Dv), q.dtype),
                   jax.ShapeDtypeStruct((B, Lq, 1), jnp.float32)),
        grid_spec=pltpu.PrefetchScalarGridSpec(
            num_scalar_prefetch=0,
            grid=(B, nq, nk),
            in_specs=in_specs,
            out_specs=[
                pl.BlockSpec((1, tq, Dv), lambda b, qi, ki: (b, qi, 0)),
                pl.BlockSpec((1, tq, 1), lambda b, qi, ki: (b, qi, 0)),
            ],
            scratch_shapes=[
                pltpu.VMEM((tq, Dk), q.dtype),      # cached scaled q
                pltpu.VMEM((tq, 1), jnp.float32),   # running max m
                pltpu.VMEM((tq, 1), jnp.float32),   # running sum l
                pltpu.VMEM((tq, Dv), jnp.float32),  # output accumulator
            ]),
        compiler_params=_cparams(("parallel", "parallel", "arbitrary")),
    )(*args)

    if not return_attn:
        return out, None

    # ---- Exact attention weights from lse (fully parallel, lane-dense). ---
    in_specs2 = [
        pl.BlockSpec((1, tq, Dk), lambda b, qi, ki: (b, qi, 0)),
        pl.BlockSpec((1, tk, Dk), lambda b, qi, ki: (b, ki, 0)),  # ki -> Lk axis
    ]
    args2 = [q, k]
    if has_mask:
        in_specs2.append(_mask_block_spec(mshape, 1, tq, tk, 3))
        args2.append(mask_arr)
    in_specs2.append(pl.BlockSpec((1, tq, 1), lambda b, qi, ki: (b, qi, 0)))
    args2.append(lse)

    attn = pl.pallas_call(
        functools.partial(_attn_weights_kernel, inv_scale, has_mask),
        out_shape=jax.ShapeDtypeStruct((B, Lq, Lk), q.dtype),
        grid_spec=pltpu.PrefetchScalarGridSpec(
            num_scalar_prefetch=0,
            grid=(B, nq, nk),
            in_specs=in_specs2,
            out_specs=pl.BlockSpec((1, tq, tk), lambda b, qi, ki: (b, qi, ki))),
        compiler_params=_cparams(("parallel", "parallel", "parallel")),
    )(*args2)
    return out, attn


# ---------------------------------------------------------------------------
# Reference & self-test
# ---------------------------------------------------------------------------

def _reference(q, k, v, scale, mask=None):
    u = jnp.einsum("bqd,bkd->bqk", q.astype(jnp.float32),
                   k.astype(jnp.float32)) / scale
    if mask is not None:
        u = jnp.where(jnp.asarray(mask), jnp.float32(-1e9), u)
    attn = jax.nn.softmax(u, axis=-1)
    out = jnp.einsum("bqk,bkd->bqd", attn, v.astype(jnp.float32))
    return out, attn


def _check(q, k, v, scale, mask=None, **kw):
    out, attn = self_attention(q, k, v, scale, mask=mask, **kw)
    out = jax.block_until_ready(out)
    ref_out, ref_attn = _reference(q, k, v, scale, mask=mask)
    assert jnp.allclose(out, ref_out, atol=2e-4, rtol=2e-3), "output mismatch"
    if kw.get("return_attn", True):
        attn = jax.block_until_ready(attn)
        assert jnp.allclose(attn, ref_attn, atol=2e-4, rtol=2e-3), "attn mismatch"
    else:
        assert attn is None


if __name__ == "__main__":
    key = jax.random.PRNGKey(0)
    keys = jax.random.split(key, 9)

    # Small shapes matching the module's typical toy usage (fused path,
    # batch-folded into a single grid step).
    B, Lq, Lk, Dk, Dv = 2, 8, 8, 32, 32
    scale = float(Dk) ** 0.5
    q = jax.random.normal(keys[0], (B, Lq, Dk), dtype=jnp.float32)
    k = jax.random.normal(keys[1], (B, Lk, Dk), dtype=jnp.float32)
    v = jax.random.normal(keys[2], (B, Lk, Dv), dtype=jnp.float32)
    mask = jax.random.bernoulli(keys[3], 0.2, (B, Lq, Lk))
    mask2d = jax.random.bernoulli(keys[4], 0.2, (Lq, Lk))

    _check(q, k, v, scale)                       # fused, no mask
    _check(q, k, v, scale, mask=mask)            # fused, full (B,Lq,Lk) mask
    _check(q, k, v, scale, mask=mask2d)          # fused, broadcastable mask
    _check(q, k, v, scale, return_attn=False)    # fused, output only

    # Moderate shapes forced through the tiled flash path (nq=2, nk=2) and
    # also through the default fused path.
    B2, Lq2, Lk2, D2 = 1, 256, 512, 64
    scale2 = float(D2) ** 0.5
    q2 = jax.random.normal(keys[5], (B2, Lq2, D2), dtype=jnp.float32)
    k2 = jax.random.normal(keys[6], (B2, Lk2, D2), dtype=jnp.float32)
    v2 = jax.random.normal(keys[7], (B2, Lk2, D2), dtype=jnp.float32)
    mask2 = jax.random.bernoulli(keys[8], 0.2, (B2, Lq2, Lk2))

    _check(q2, k2, v2, scale2, q_tile=128, k_tile=256)               # flash + attn
    _check(q2, k2, v2, scale2, mask=mask2, q_tile=128, k_tile=256)   # flash + mask
    _check(q2, k2, v2, scale2, mask=mask2, q_tile=128, k_tile=256,
           return_attn=False)                                        # flash only
    _check(q2, k2, v2, scale2, mask=mask2)                           # default -> fused

    print("KERNEL_OK")
</pallas_src>

<mosaic_0001>
module attributes {stable_mosaic.version = 11 : i64} {
  func.func @_fused_kernel(%arg0: i32, %arg1: i32, %arg2: memref<2x8x32xf32, #tpu.memory_space<vmem>>, %arg3: memref<2x8x32xf32, #tpu.memory_space<vmem>>, %arg4: memref<2x8x32xf32, #tpu.memory_space<vmem>>, %arg5: memref<2x8x32xf32, #tpu.memory_space<vmem>>, %arg6: memref<2x8x8xf32, #tpu.memory_space<vmem>>) attributes {dimension_semantics = [#tpu.dimension_semantics<parallel>, #tpu.dimension_semantics<parallel>], iteration_bounds = array<i64: 1, 1>, scalar_prefetch = 0 : i64, scratch_operands = 0 : i64, tpu.core_type = #tpu.core_type<tc>, window_params = [{transform_indices = @transform_0, window_bounds = array<i64: 2, 8, 32>}, {transform_indices = @transform_1, window_bounds = array<i64: 2, 8, 32>}, {transform_indices = @transform_2, window_bounds = array<i64: 2, 8, 32>}, {transform_indices = @transform_3, window_bounds = array<i64: 2, 8, 32>}, {transform_indices = @transform_4, window_bounds = array<i64: 2, 8, 8>}]} {
    %c0 = arith.constant 0 : index
    %c0_0 = arith.constant 0 : index
    %c0_1 = arith.constant 0 : index
    %0 = vector.load %arg2[%c0, %c0_0, %c0_1] : memref<2x8x32xf32, #tpu.memory_space<vmem>>, vector<2x8x32xf32>
    %cst = arith.constant 0.176776692 : f32
    %1 = vector.broadcast %cst : f32 to vector<2x8x32xf32>
    %2 = arith.mulf %0, %1 : vector<2x8x32xf32>
    %c0_2 = arith.constant 0 : index
    %c0_3 = arith.constant 0 : index
    %c0_4 = arith.constant 0 : index
    %3 = vector.load %arg3[%c0_2, %c0_3, %c0_4] : memref<2x8x32xf32, #tpu.memory_space<vmem>>, vector<2x8x32xf32>
    "tpu.trace_start"() <{level = 10 : i32, message = "bqd,bkd->bqk"}> : () -> ()
    %cst_5 = arith.constant dense<0.000000e+00> : vector<2x8x8xf32>
    %4 = tpu.matmul %2, %3, %cst_5 {dimension_numbers = #tpu.dot_dimension_numbers<[2], [2], [1], [1], [0, 0, 0, 1, 1, 1], [0], [0]>} : vector<2x8x32xf32>, vector<2x8x32xf32>, vector<2x8x8xf32> -> vector<2x8x8xf32>
    "tpu.trace_stop"() : () -> ()
    %cst_6 = arith.constant dense<0xFF800000> : vector<2x8xf32>
    %5 = vector.multi_reduction <maximumf>, %4, %cst_6 [2] : vector<2x8x8xf32> to vector<2x8xf32>
    %6 = vector.shape_cast %5 : vector<2x8xf32> to vector<2x8x1xf32>
    %7 = vector.broadcast %6 : vector<2x8x1xf32> to vector<2x8x8xf32>
    %8 = arith.subf %4, %7 : vector<2x8x8xf32>
    %9 = math.exp %8 : vector<2x8x8xf32>
    %cst_7 = arith.constant dense<0.000000e+00> : vector<2x8xf32>
    %10 = vector.multi_reduction <add>, %9, %cst_7 [2] : vector<2x8x8xf32> to vector<2x8xf32>
    %11 = vector.shape_cast %10 : vector<2x8xf32> to vector<2x8x1xf32>
    %12 = tpu.reciprocal %11 {approx = true} : vector<2x8x1xf32> -> vector<2x8x1xf32>
    %13 = arith.mulf %11, %12 : vector<2x8x1xf32>
    %cst_8 = arith.constant 2.000000e+00 : f32
    %14 = vector.broadcast %cst_8 : f32 to vector<2x8x1xf32>
    %15 = arith.subf %14, %13 : vector<2x8x1xf32>
    %16 = arith.mulf %12, %15 : vector<2x8x1xf32>
    %17 = vector.broadcast %16 : vector<2x8x1xf32> to vector<2x8x8xf32>
    %18 = arith.mulf %9, %17 : vector<2x8x8xf32>
    %c0_9 = arith.constant 0 : index
    %c0_10 = arith.constant 0 : index
    %c0_11 = arith.constant 0 : index
    %19 = vector.load %arg6[%c0_9, %c0_10, %c0_11] : memref<2x8x8xf32, #tpu.memory_space<vmem>>, vector<2x8x8xf32>
    tpu.vector_store %arg6[%c0_9, %c0_10, %c0_11], %18 {strides = array<i32>} : memref<2x8x8xf32, #tpu.memory_space<vmem>>, vector<2x8x8xf32>,
    %c0_12 = arith.constant 0 : index
    %c0_13 = arith.constant 0 : index
    %c0_14 = arith.constant 0 : index
    %20 = vector.load %arg4[%c0_12, %c0_13, %c0_14] : memref<2x8x32xf32, #tpu.memory_space<vmem>>, vector<2x8x32xf32>
    "tpu.trace_start"() <{level = 10 : i32, message = "bqk,bkd->bqd"}> : () -> ()
    %cst_15 = arith.constant dense<0.000000e+00> : vector<2x8x32xf32>
    %21 = tpu.matmul %18, %20, %cst_15 {dimension_numbers = #tpu.dot_dimension_numbers<[2], [1], [1], [2], [0, 0, 0, 1, 1, 2], [0], [0]>} : vector<2x8x8xf32>, vector<2x8x32xf32>, vector<2x8x32xf32> -> vector<2x8x32xf32>
    "tpu.trace_stop"() : () -> ()
    %c0_16 = arith.constant 0 : index
    %c0_17 = arith.constant 0 : index
    %c0_18 = arith.constant 0 : index
    %22 = vector.load %arg5[%c0_16, %c0_17, %c0_18] : memref<2x8x32xf32, #tpu.memory_space<vmem>>, vector<2x8x32xf32>
    tpu.vector_store %arg5[%c0_16, %c0_17, %c0_18], %21 {strides = array<i32>} : memref<2x8x32xf32, #tpu.memory_space<vmem>>, vector<2x8x32xf32>,
    return
  }
  func.func @transform_0(%arg0: i32, %arg1: i32) -> (i32, i32, i32) {
    %c0_i32 = arith.constant 0 : i32
    %c0_i32_0 = arith.constant 0 : i32
    return %arg0, %arg1, %c0_i32 : i32, i32, i32
  }
  func.func @transform_1(%arg0: i32, %arg1: i32) -> (i32, i32, i32) {
    %c0_i32 = arith.constant 0 : i32
    %c0_i32_0 = arith.constant 0 : i32
    %c0_i32_1 = arith.constant 0 : i32
    return %arg0, %c0_i32, %c0_i32_0 : i32, i32, i32
  }
  func.func @transform_2(%arg0: i32, %arg1: i32) -> (i32, i32, i32) {
    %c0_i32 = arith.constant 0 : i32
    %c0_i32_0 = arith.constant 0 : i32
    %c0_i32_1 = arith.constant 0 : i32
    return %arg0, %c0_i32, %c0_i32_0 : i32, i32, i32
  }
  func.func @transform_3(%arg0: i32, %arg1: i32) -> (i32, i32, i32) {
    %c0_i32 = arith.constant 0 : i32
    %c0_i32_0 = arith.constant 0 : i32
    return %arg0, %arg1, %c0_i32 : i32, i32, i32
  }
  func.func @transform_4(%arg0: i32, %arg1: i32) -> (i32, i32, i32) {
    %c0_i32 = arith.constant 0 : i32
    %c0_i32_0 = arith.constant 0 : i32
    return %arg0, %arg1, %c0_i32 : i32, i32, i32
  }
}

</mosaic_0001>

<llo_original>
// kernel: tpu_custom_call.1
$region0: #{tpu_custom_call.1}
  #allocation0 [shape = 'u32[]', space=smem, size = 0x4, offset = 0x4, fixed_abs, tag = 'smem constant byte address 0x4 - core index']
  #allocation1 [shape = 'u32[144,128]{1,0:T(1,128)}', space=vmem, size = 0x12000, scoped, tag = 'internal scratch']
  %s0 = inlined_call_operand.hbm [shape: f32[2,8,32], index: 0, kind: input, shape index: {}]
  %s1 = inlined_call_operand.hbm [shape: f32[2,8,32], index: 1, kind: input, shape index: {}]
  %s2 = inlined_call_operand.hbm [shape: f32[2,8,32], index: 2, kind: input, shape index: {}]
  %s3 = inlined_call_operand.hbm [shape: f32[2,8,32], index: 3, kind: output, shape index: {0}]
  %s4 = inlined_call_operand.hbm [shape: f32[2,8,8], index: 4, kind: output, shape index: {1}]
  %5 = xla_tuple %s3, %s4
  %s6 = sld [smem:[#allocation0]]
  $region42: #{tpu_custom_call.1} parent=0
    _
  %s8 = ssub.s32 1, %s6
  %s9 = scalar_select 0, %s8, %s6
  $region1: #{tpu_custom_call.1} parent=0
    #allocation2 [shape = 'u8[8192]{0}', space=vmem, size = 0x2000, scoped, tag = 'input window, operand 0, single buffered']
    #allocation3 [shape = 's32[1]{0}', space=sflag, size = 0x4, scoped, tag = 'scoped memory for tpu_custom_call.1']
    #allocation4 [shape = 's32[1]{0}', space=sflag, size = 0x4, scoped, tag = 'scoped memory for tpu_custom_call.1']
    #allocation5 [shape = 'u8[8192]{0}', space=vmem, size = 0x2000, scoped, tag = 'input window, operand 1, single buffered']
    #allocation6 [shape = 's32[1]{0}', space=sflag, size = 0x4, scoped, tag = 'scoped memory for tpu_custom_call.1']
    #allocation7 [shape = 'u8[8192]{0}', space=vmem, size = 0x2000, scoped, tag = 'input window, operand 2, single buffered']
    #allocation8 [shape = 'u8[8192]{0}', space=vmem, size = 0x2000, scoped, tag = 'output window, operand 0, single buffered']
    #allocation9 [shape = 'u8[8192]{0}', space=vmem, size = 0x2000, scoped, tag = 'output window, operand 1, single buffered']
    #allocation10 [shape = 's32[1]{0}', space=sflag, size = 0x4, scoped, tag = 'scoped memory for tpu_custom_call.1']
    %10 = vsyncpa [#allocation3], 0
    %11 = vsyncpa [#allocation6], 0
    %12 = vsyncpa [#allocation4], 0
    %13 = vsyncpa [#allocation10], 0
    // Predicated region
    $region2: #{tpu_custom_call.1} parent=1 // pred_check
      _
    $region3: #{tpu_custom_call.1} parent=1 // pred_check_branch
      %15 = sbr.rel (0) target = $region5
    $region4: #{tpu_custom_call.1} parent=1 // pred_region
      %s17 = ssub.s32 256, 256
      %18 = vsyncadd [#allocation3], %s17
      %s19 = sshll.u32 [#allocation2], 4
      %s20 = int_to_ptr.vmem [resolvable:$true] %s19
      %25 = dma.hbm_to_vmem [thread:$0]  %s0, 256, %s20, [#allocation3], 128, 128, 8
    $region5: #{tpu_custom_call.1} parent=1 // pred_fallthru
      _
    // Predicated region
    $region6: #{tpu_custom_call.1} parent=1 // pred_check
      _
    $region7: #{tpu_custom_call.1} parent=1 // pred_check_branch
      %27 = sbr.rel (0) target = $region9
    $region8: #{tpu_custom_call.1} parent=1 // pred_region
      %s29 = ssub.s32 256, 256
      %30 = vsyncadd [#allocation6], %s29
      %s31 = sshll.u32 [#allocation5], 4
      %s32 = int_to_ptr.vmem [resolvable:$true] %s31
      %37 = dma.hbm_to_vmem [thread:$0]  %s1, 256, %s32, [#allocation6], 128, 128, 8
    $region9: #{tpu_custom_call.1} parent=1 // pred_fallthru
      _
    // Predicated region
    $region10: #{tpu_custom_call.1} parent=1 // pred_check
      _
    $region11: #{tpu_custom_call.1} parent=1 // pred_check_branch
      %39 = sbr.rel (0) target = $region13
    $region12: #{tpu_custom_call.1} parent=1 // pred_region
      %s41 = ssub.s32 256, 256
      %42 = vsyncadd [#allocation6], %s41
      %s43 = sshll.u32 [#allocation7], 4
      %s44 = int_to_ptr.vmem [resolvable:$true] %s43
      %49 = dma.hbm_to_vmem [thread:$0]  %s2, 256, %s44, [#allocation6], 128, 128, 8
    $region13: #{tpu_custom_call.1} parent=1 // pred_fallthru
      _
    // Predicated region
    $region14: #{tpu_custom_call.1} parent=1 // pred_check
      _
    $region15: #{tpu_custom_call.1} parent=1 // pred_check_branch
      %51 = sbr.rel (0) target = $region17
    $region16: #{tpu_custom_call.1} parent=1 // pred_region
      %52 = dma.done [#allocation3], 256
    $region17: #{tpu_custom_call.1} parent=1 // pred_fallthru
      _
    // Predicated region
    $region18: #{tpu_custom_call.1} parent=1 // pred_check
      _
    $region19: #{tpu_custom_call.1} parent=1 // pred_check_branch
      %54 = sbr.rel (0) target = $region21
    $region20: #{tpu_custom_call.1} parent=1 // pred_region
      %55 = dma.done [#allocation6], 256
    $region21: #{tpu_custom_call.1} parent=1 // pred_fallthru
      _
    // Predicated region
    $region22: #{tpu_custom_call.1} parent=1 // pred_check
      _
    $region23: #{tpu_custom_call.1} parent=1 // pred_check_branch
      %57 = sbr.rel (0) target = $region25
    $region24: #{tpu_custom_call.1} parent=1 // pred_region
      %58 = dma.done [#allocation6], 256
    $region25: #{tpu_custom_call.1} parent=1 // pred_fallthru
      _
    %v59 = vld [vmem:[#allocation2] sm:$0xff]
    %v60 = vld [vmem:[#allocation2 + $0x8] sm:$0xff]
    %v61 = vmul.f32 %v59, 0.17677669
    %v62 = vmul.f32 %v60, 0.17677669
    %v63 = vld [vmem:[#allocation5] sm:$0xff]
    %v64 = vld [vmem:[#allocation5 + $0x8] sm:$0xff]
    %vm65 = vcmask 261120
    %v67 = vsel %vm65, %v61, 0
    %v70 = vsel %vm65, %v63, 0
    %72 = vmatprep.subr.mxu0 0.0
    %73 = vmatpush1.xpose.msra.mxu0 0.0
    %74 = vmatprep.subr.mxu0 0.0
    %75 = vmatpush1.xpose.msra.mxu0 0.0
    %76 = vmatprep.subr.mxu0 0.0
    %77 = vmatpush1.xpose.msra.mxu0 0.0
    %78 = vmatprep.subr.mxu0 0.0
    %79 = vmatpush1.xpose.msra.mxu0 0.0
    %80 = vmatprep.subr.mxu0 0.0
    %81 = vmatpush1.xpose.msra.mxu0 0.0
    %82 = vmatprep.subr.mxu0 0.0
    %83 = vmatpush1.xpose.msra.mxu0 0.0
    %84 = vmatprep.subr.mxu0 0.0
    %85 = vmatpush1.xpose.msra.mxu0 0.0
    %86 = vmatprep.subr.mxu0 0.0
    %87 = vmatpush1.xpose.msra.mxu0 0.0
    %88 = vmatprep.subr.mxu0 0.0
    %89 = vmatpush1.xpose.msra.mxu0 0.0
    %90 = vmatprep.subr.mxu0 0.0
    %91 = vmatpush1.xpose.msra.mxu0 0.0
    %92 = vmatprep.subr.mxu0 0.0
    %93 = vmatpush1.xpose.msra.mxu0 0.0
    %94 = vmatprep.subr.mxu0 0.0
    %95 = vmatpush1.xpose.msra.mxu0 0.0
    %96 = vmatprep.subr.mxu0 0.0
    %97 = vmatpush1.xpose.msra.mxu0 0.0
    %98 = vmatprep.subr.mxu0 0.0
    %99 = vmatpush1.xpose.msra.mxu0 0.0
    %100 = vmatprep.subr.mxu0 0.0
    %101 = vmatpush1.xpose.msra.mxu0 0.0
    %102 = vmatprep.subr.mxu0 0.0
    %103 = vmatpush1.xpose.msra.mxu0 %v70
    %104 = vmatprep.subr.mxu0 0.0
    %105 = vmatpush2.xpose.msra.mxu0 0.0
    %106 = vmatprep.subr.mxu0 0.0
    %107 = vmatpush2.xpose.msra.mxu0 0.0
    %108 = vmatprep.subr.mxu0 0.0
    %109 = vmatpush2.xpose.msra.mxu0 0.0
    %110 = vmatprep.subr.mxu0 0.0
    %111 = vmatpush2.xpose.msra.mxu0 0.0
    %112 = vmatprep.subr.mxu0 0.0
    %113 = vmatpush2.xpose.msra.mxu0 0.0
    %114 = vmatprep.subr.mxu0 0.0
    %115 = vmatpush2.xpose.msra.mxu0 0.0
    %116 = vmatprep.subr.mxu0 0.0
    %117 = vmatpush2.xpose.msra.mxu0 0.0
    %118 = vmatprep.subr.mxu0 0.0
    %119 = vmatpush2.xpose.msra.mxu0 0.0
    %120 = vmatprep.subr.mxu0 0.0
    %121 = vmatpush2.xpose.msra.mxu0 0.0
    %122 = vmatprep.subr.mxu0 0.0
    %123 = vmatpush2.xpose.msra.mxu0 0.0
    %124 = vmatprep.subr.mxu0 0.0
    %125 = vmatpush2.xpose.msra.mxu0 0.0
    %126 = vmatprep.subr.mxu0 0.0
    %127 = vmatpush2.xpose.msra.mxu0 0.0
    %128 = vmatprep.subr.mxu0 0.0
    %129 = vmatpush2.xpose.msra.mxu0 0.0
    %130 = vmatprep.subr.mxu0 0.0
    %131 = vmatpush2.xpose.msra.mxu0 0.0
    %132 = vmatprep.subr.mxu0 0.0
    %133 = vmatpush2.xpose.msra.mxu0 0.0
    %134 = vmatprep.subr.mxu0 0.0
    %135 = vmatpush2.xpose.msra.mxu0 0.0
    %136 = vmatprep.mubr.f32.mxu0 0.0
    %137 = vmatmul.mubr.f32.gmra.mxu0 %v67
    %v138 = vpop.f32.mrf.mxu0
    %v139 = vadd.f32 0.0, %v138
    %v140 = vpop.f32.mrf.mxu0
    %141 = vdwg.mxu0
    %v143 = vsel %vm65, %v62, 0
    %v146 = vsel %vm65, %v64, 0
    %148 = vmatprep.subr.mxu0 0.0
    %149 = vmatpush1.xpose.msra.mxu0 0.0
    %150 = vmatprep.subr.mxu0 0.0
    %151 = vmatpush1.xpose.msra.mxu0 0.0
    %152 = vmatprep.subr.mxu0 0.0
    %153 = vmatpush1.xpose.msra.mxu0 0.0
    %154 = vmatprep.subr.mxu0 0.0
    %155 = vmatpush1.xpose.msra.mxu0 0.0
    %156 = vmatprep.subr.mxu0 0.0
    %157 = vmatpush1.xpose.msra.mxu0 0.0
    %158 = vmatprep.subr.mxu0 0.0
    %159 = vmatpush1.xpose.msra.mxu0 0.0
    %160 = vmatprep.subr.mxu0 0.0
    %161 = vmatpush1.xpose.msra.mxu0 0.0
    %162 = vmatprep.subr.mxu0 0.0
    %163 = vmatpush1.xpose.msra.mxu0 0.0
    %164 = vmatprep.subr.mxu0 0.0
    %165 = vmatpush1.xpose.msra.mxu0 0.0
    %166 = vmatprep.subr.mxu0 0.0
    %167 = vmatpush1.xpose.msra.mxu0 0.0
    %168 = vmatprep.subr.mxu0 0.0
    %169 = vmatpush1.xpose.msra.mxu0 0.0
    %170 = vmatprep.subr.mxu0 0.0
    %171 = vmatpush1.xpose.msra.mxu0 0.0
    %172 = vmatprep.subr.mxu0 0.0
    %173 = vmatpush1.xpose.msra.mxu0 0.0
    %174 = vmatprep.subr.mxu0 0.0
    %175 = vmatpush1.xpose.msra.mxu0 0.0
    %176 = vmatprep.subr.mxu0 0.0
    %177 = vmatpush1.xpose.msra.mxu0 0.0
    %178 = vmatprep.subr.mxu0 0.0
    %179 = vmatpush1.xpose.msra.mxu0 %v146
    %180 = vmatprep.subr.mxu0 0.0
    %181 = vmatpush2.xpose.msra.mxu0 0.0
    %182 = vmatprep.subr.mxu0 0.0
    %183 = vmatpush2.xpose.msra.mxu0 0.0
    %184 = vmatprep.subr.mxu0 0.0
    %185 = vmatpush2.xpose.msra.mxu0 0.0
    %186 = vmatprep.subr.mxu0 0.0
    %187 = vmatpush2.xpose.msra.mxu0 0.0
    %188 = vmatprep.subr.mxu0 0.0
    %189 = vmatpush2.xpose.msra.mxu0 0.0
    %190 = vmatprep.subr.mxu0 0.0
    %191 = vmatpush2.xpose.msra.mxu0 0.0
    %192 = vmatprep.subr.mxu0 0.0
    %193 = vmatpush2.xpose.msra.mxu0 0.0
    %194 = vmatprep.subr.mxu0 0.0
    %195 = vmatpush2.xpose.msra.mxu0 0.0
    %196 = vmatprep.subr.mxu0 0.0
    %197 = vmatpush2.xpose.msra.mxu0 0.0
    %198 = vmatprep.subr.mxu0 0.0
    %199 = vmatpush2.xpose.msra.mxu0 0.0
    %200 = vmatprep.subr.mxu0 0.0
    %201 = vmatpush2.xpose.msra.mxu0 0.0
    %202 = vmatprep.subr.mxu0 0.0
    %203 = vmatpush2.xpose.msra.mxu0 0.0
    %204 = vmatprep.subr.mxu0 0.0
    %205 = vmatpush2.xpose.msra.mxu0 0.0
    %206 = vmatprep.subr.mxu0 0.0
    %207 = vmatpush2.xpose.msra.mxu0 0.0
    %208 = vmatprep.subr.mxu0 0.0
    %209 = vmatpush2.xpose.msra.mxu0 0.0
    %210 = vmatprep.subr.mxu0 0.0
    %211 = vmatpush2.xpose.msra.mxu0 0.0
    %212 = vmatprep.mubr.f32.mxu0 0.0
    %213 = vmatmul.mubr.f32.gmra.mxu0 %v143
    %v214 = vpop.f32.mrf.mxu0
    %v215 = vadd.f32 0.0, %v214
    %v216 = vpop.f32.mrf.mxu0
    %217 = vdwg.mxu0
    %vm218 = vcmask 64512
    %v219 = vsel %vm218, %v139, -inf
    %220 = vmax.xlane.f32.xlu0 %v219
    %v221 = vpop.xlane.xlu0 %220
    %v222 = vsel %vm218, %v215, -inf
    %223 = vmax.xlane.f32.xlu0 %v222
    %v224 = vpop.xlane.xlu0 %223
    %v225 = vsub.f32 %v139, %v221
    %v226 = vsub.f32 %v215, %v224
    %v227 = vmul.f32 %v225, 1.442695
    %v228 = vpow.pop %v227
    %v229 = vmul.f32 %v226, 1.442695
    %v230 = vpow.pop %v229
    %v231 = vsel %vm218, %v228, 0.0
    %232 = vadd.xlane.f32.xlu0 %v231
    %v233 = vpop.xlane.xlu0 %232
    %v234 = vsel %vm218, %v230, 0.0
    %235 = vadd.xlane.f32.xlu0 %v234
    %v236 = vpop.xlane.xlu0 %235
    %v237 = vrcp.pop %v233
    %v238 = vrcp.pop %v236
    %v239 = vmul.f32 %v233, %v237
    %v240 = vmul.f32 %v236, %v238
    %v241 = vsub.f32 2.0, %v239
    %v242 = vsub.f32 2.0, %v240
    %v243 = vmul.f32 %v237, %v241
    %v244 = vmul.f32 %v238, %v242
    %v245 = vmul.f32 %v228, %v243
    %v246 = vmul.f32 %v230, %v244
    %247 = vst.msk [vmem:[#allocation9] sm:$0xff] %vm218, %v245
    %248 = vst.msk [vmem:[#allocation9 + $0x8] sm:$0xff] %vm218, %v246
    %v249 = vld [vmem:[#allocation7] sm:$0xff]
    %v250 = vld [vmem:[#allocation7 + $0x8] sm:$0xff]
    %v252 = vsel %vm218, %v245, 0
    %254 = vmatprep.subr.mxu0 0.0
    %255 = vmatpush1.msra.mxu0 0.0
    %256 = vmatprep.subr.mxu0 0.0
    %257 = vmatpush1.msra.mxu0 0.0
    %258 = vmatprep.subr.mxu0 0.0
    %259 = vmatpush1.msra.mxu0 0.0
    %260 = vmatprep.subr.mxu0 0.0
    %261 = vmatpush1.msra.mxu0 0.0
    %262 = vmatprep.subr.mxu0 0.0
    %263 = vmatpush1.msra.mxu0 0.0
    %264 = vmatprep.subr.mxu0 0.0
    %265 = vmatpush1.msra.mxu0 0.0
    %266 = vmatprep.subr.mxu0 0.0
    %267 = vmatpush1.msra.mxu0 0.0
    %268 = vmatprep.subr.mxu0 0.0
    %269 = vmatpush1.msra.mxu0 0.0
    %270 = vmatprep.subr.mxu0 0.0
    %271 = vmatpush1.msra.mxu0 0.0
    %272 = vmatprep.subr.mxu0 0.0
    %273 = vmatpush1.msra.mxu0 0.0
    %274 = vmatprep.subr.mxu0 0.0
    %275 = vmatpush1.msra.mxu0 0.0
    %276 = vmatprep.subr.mxu0 0.0
    %277 = vmatpush1.msra.mxu0 0.0
    %278 = vmatprep.subr.mxu0 0.0
    %279 = vmatpush1.msra.mxu0 0.0
    %280 = vmatprep.subr.mxu0 0.0
    %281 = vmatpush1.msra.mxu0 0.0
    %282 = vmatprep.subr.mxu0 0.0
    %283 = vmatpush1.msra.mxu0 0.0
    %284 = vmatprep.subr.mxu0 0.0
    %285 = vmatpush1.msra.mxu0 %v249
    %286 = vmatprep.subr.mxu0 0.0
    %287 = vmatpush2.msra.mxu0 0.0
    %288 = vmatprep.subr.mxu0 0.0
    %289 = vmatpush2.msra.mxu0 0.0
    %290 = vmatprep.subr.mxu0 0.0
    %291 = vmatpush2.msra.mxu0 0.0
    %292 = vmatprep.subr.mxu0 0.0
    %293 = vmatpush2.msra.mxu0 0.0
    %294 = vmatprep.subr.mxu0 0.0
    %295 = vmatpush2.msra.mxu0 0.0
    %296 = vmatprep.subr.mxu0 0.0
    %297 = vmatpush2.msra.mxu0 0.0
    %298 = vmatprep.subr.mxu0 0.0
    %299 = vmatpush2.msra.mxu0 0.0
    %300 = vmatprep.subr.mxu0 0.0
    %301 = vmatpush2.msra.mxu0 0.0
    %302 = vmatprep.subr.mxu0 0.0
    %303 = vmatpush2.msra.mxu0 0.0
    %304 = vmatprep.subr.mxu0 0.0
    %305 = vmatpush2.msra.mxu0 0.0
    %306 = vmatprep.subr.mxu0 0.0
    %307 = vmatpush2.msra.mxu0 0.0
    %308 = vmatprep.subr.mxu0 0.0
    %309 = vmatpush2.msra.mxu0 0.0
    %310 = vmatprep.subr.mxu0 0.0
    %311 = vmatpush2.msra.mxu0 0.0
    %312 = vmatprep.subr.mxu0 0.0
    %313 = vmatpush2.msra.mxu0 0.0
    %314 = vmatprep.subr.mxu0 0.0
    %315 = vmatpush2.msra.mxu0 0.0
    %316 = vmatprep.subr.mxu0 0.0
    %317 = vmatpush2.msra.mxu0 0.0
    %318 = vmatprep.mubr.f32.mxu0 0.0
    %319 = vmatmul.mubr.f32.gmra.mxu0 %v252
    %v320 = vpop.f32.mrf.mxu0
    %v321 = vadd.f32 0.0, %v320
    %v322 = vpop.f32.mrf.mxu0
    %323 = vdwg.mxu0
    %v325 = vsel %vm218, %v246, 0
    %327 = vmatprep.subr.mxu0 0.0
    %328 = vmatpush1.msra.mxu0 0.0
    %329 = vmatprep.subr.mxu0 0.0
    %330 = vmatpush1.msra.mxu0 0.0
    %331 = vmatprep.subr.mxu0 0.0
    %332 = vmatpush1.msra.mxu0 0.0
    %333 = vmatprep.subr.mxu0 0.0
    %334 = vmatpush1.msra.mxu0 0.0
    %335 = vmatprep.subr.mxu0 0.0
    %336 = vmatpush1.msra.mxu0 0.0
    %337 = vmatprep.subr.mxu0 0.0
    %338 = vmatpush1.msra.mxu0 0.0
    %339 = vmatprep.subr.mxu0 0.0
    %340 = vmatpush1.msra.mxu0 0.0
    %341 = vmatprep.subr.mxu0 0.0
    %342 = vmatpush1.msra.mxu0 0.0
    %343 = vmatprep.subr.mxu0 0.0
    %344 = vmatpush1.msra.mxu0 0.0
    %345 = vmatprep.subr.mxu0 0.0
    %346 = vmatpush1.msra.mxu0 0.0
    %347 = vmatprep.subr.mxu0 0.0
    %348 = vmatpush1.msra.mxu0 0.0
    %349 = vmatprep.subr.mxu0 0.0
    %350 = vmatpush1.msra.mxu0 0.0
    %351 = vmatprep.subr.mxu0 0.0
    %352 = vmatpush1.msra.mxu0 0.0
    %353 = vmatprep.subr.mxu0 0.0
    %354 = vmatpush1.msra.mxu0 0.0
    %355 = vmatprep.subr.mxu0 0.0
    %356 = vmatpush1.msra.mxu0 0.0
    %357 = vmatprep.subr.mxu0 0.0
    %358 = vmatpush1.msra.mxu0 %v250
    %359 = vmatprep.subr.mxu0 0.0
    %360 = vmatpush2.msra.mxu0 0.0
    %361 = vmatprep.subr.mxu0 0.0
    %362 = vmatpush2.msra.mxu0 0.0
    %363 = vmatprep.subr.mxu0 0.0
    %364 = vmatpush2.msra.mxu0 0.0
    %365 = vmatprep.subr.mxu0 0.0
    %366 = vmatpush2.msra.mxu0 0.0
    %367 = vmatprep.subr.mxu0 0.0
    %368 = vmatpush2.msra.mxu0 0.0
    %369 = vmatprep.subr.mxu0 0.0
    %370 = vmatpush2.msra.mxu0 0.0
    %371 = vmatprep.subr.mxu0 0.0
    %372 = vmatpush2.msra.mxu0 0.0
    %373 = vmatprep.subr.mxu0 0.0
    %374 = vmatpush2.msra.mxu0 0.0
    %375 = vmatprep.subr.mxu0 0.0
    %376 = vmatpush2.msra.mxu0 0.0
    %377 = vmatprep.subr.mxu0 0.0
    %378 = vmatpush2.msra.mxu0 0.0
    %379 = vmatprep.subr.mxu0 0.0
    %380 = vmatpush2.msra.mxu0 0.0
    %381 = vmatprep.subr.mxu0 0.0
    %382 = vmatpush2.msra.mxu0 0.0
    %383 = vmatprep.subr.mxu0 0.0
    %384 = vmatpush2.msra.mxu0 0.0
    %385 = vmatprep.subr.mxu0 0.0
    %386 = vmatpush2.msra.mxu0 0.0
    %387 = vmatprep.subr.mxu0 0.0
    %388 = vmatpush2.msra.mxu0 0.0
    %389 = vmatprep.subr.mxu0 0.0
    %390 = vmatpush2.msra.mxu0 0.0
    %391 = vmatprep.mubr.f32.mxu0 0.0
    %392 = vmatmul.mubr.f32.gmra.mxu0 %v325
    %v393 = vpop.f32.mrf.mxu0
    %v394 = vadd.f32 0.0, %v393
    %v395 = vpop.f32.mrf.mxu0
    %396 = vdwg.mxu0
    %397 = vst.msk [vmem:[#allocation8] sm:$0xff] %vm65, %v321
    %398 = vst.msk [vmem:[#allocation8 + $0x8] sm:$0xff] %vm65, %v394
    // Predicated region
    $region26: #{tpu_custom_call.1} parent=1 // pred_check
      _
    $region27: #{tpu_custom_call.1} parent=1 // pred_check_branch
      %400 = sbr.rel (0) target = $region29
    $region28: #{tpu_custom_call.1} parent=1 // pred_region
      %s402 = ssub.s32 256, 256
      %403 = vsyncadd [#allocation4], %s402
      %s404 = sshll.u32 [#allocation8], 4
      %s405 = int_to_ptr.vmem [resolvable:$true] %s404
      %410 = dma.vmem_to_hbm [thread:$0]  %s405, 256, %s3, [#allocation4], 128, 128, 8
    $region29: #{tpu_custom_call.1} parent=1 // pred_fallthru
      _
    // Predicated region
    $region30: #{tpu_custom_call.1} parent=1 // pred_check
      _
    $region31: #{tpu_custom_call.1} parent=1 // pred_check_branch
      %412 = sbr.rel (0) target = $region33
    $region32: #{tpu_custom_call.1} parent=1 // pred_region
      %s414 = ssub.s32 256, 256
      %415 = vsyncadd [#allocation10], %s414
      %s416 = sshll.u32 [#allocation9], 4
      %s417 = int_to_ptr.vmem [resolvable:$true] %s416
      %422 = dma.vmem_to_hbm [thread:$0]  %s417, 256, %s4, [#allocation10], 128, 128, 8
    $region33: #{tpu_custom_call.1} parent=1 // pred_fallthru
      _
    // Predicated region
    $region34: #{tpu_custom_call.1} parent=1 // pred_check
      _
    $region35: #{tpu_custom_call.1} parent=1 // pred_check_branch
      %424 = sbr.rel (0) target = $region37
    $region36: #{tpu_custom_call.1} parent=1 // pred_region
      %425 = dma.done [#allocation4], 256
    $region37: #{tpu_custom_call.1} parent=1 // pred_fallthru
      _
    // Predicated region
    $region38: #{tpu_custom_call.1} parent=1 // pred_check
      _
    $region39: #{tpu_custom_call.1} parent=1 // pred_check_branch
      %427 = sbr.rel (0) target = $region41
    $region40: #{tpu_custom_call.1} parent=1 // pred_region
      %428 = dma.done [#allocation10], 256
    $region41: #{tpu_custom_call.1} parent=1 // pred_fallthru
      _
    %429 = vsyncpa [#allocation3], 1
    %430 = vsyncpa [#allocation6], 1
    %431 = vsyncpa [#allocation4], 1
    %432 = vsyncpa [#allocation10], 1

</llo_original>
